<compile_context>
chip_gen: v5e
topology: v5e:2x2
jax: 0.10.0
libtpu: 0.0.40
codegen_flags: <defaults>
</compile_context>

<pallas_src>
import functools

import jax
import jax.numpy as jnp
from jax.experimental import pallas as pl
from jax.experimental.pallas import tpu as pltpu


def _round_up(v, m):
    return -(-v // m) * m


# --------------------------------------------------------------------------
# Pass 1: per-(n, c) partial sums / sums-of-squares.  x viewed as (N*Cin, HW),
# rows packed onto sublanes, reduction over lanes (spatial) per row.
# --------------------------------------------------------------------------
def _bn_stats_kernel(x_ref, sum_ref, sumsq_ref, *, hw, hw_tile):
    # x_ref:     (row_tile, hw_tile) tile of x viewed as (N*Cin, H*W)
    # sum_ref:   (row_tile, 1) resident accumulator (same block across j)
    # sumsq_ref: (row_tile, 1) resident accumulator
    j = pl.program_id(1)
    nj = pl.num_programs(1)

    @pl.when(j == 0)
    def _init():
        sum_ref[...] = jnp.zeros_like(sum_ref)
        sumsq_ref[...] = jnp.zeros_like(sumsq_ref)

    x = x_ref[...]
    if x.dtype != jnp.float32:
        x = x.astype(jnp.float32)

    def _accumulate(xv):
        sum_ref[...] += jnp.sum(xv, axis=1, keepdims=True)
        sumsq_ref[...] += jnp.sum(xv * xv, axis=1, keepdims=True)

    if hw % hw_tile != 0:
        # Only the final spatial tile is partial: mask only there.
        @pl.when(j == nj - 1)
        def _partial():
            lane = jax.lax.broadcasted_iota(jnp.int32, x.shape, dimension=1)
            _accumulate(jnp.where(j * hw_tile + lane < hw, x, 0.0))

        @pl.when(j < nj - 1)
        def _full():
            _accumulate(x)
    else:
        _accumulate(x)


# --------------------------------------------------------------------------
# Pass 2: fused (scale * x + shift) -> ReLU -> 1x1 conv, all whole-block ops.
# --------------------------------------------------------------------------
def _compress_kernel(scale_ref, shift_ref, w_ref, x_ref, o_ref, *, use_mxu):
    # scale_ref/shift_ref: (Cin, 1) f32 VMEM columns (broadcast along lanes)
    # w_ref: (Cout, Cin) f32 [MXU path]  or  (Cin, Cout) f32 [VPU/XLU path]
    # x_ref: (Cin,  hw_tile) VMEM tile (channels on sublanes, spatial on lanes)
    # o_ref: (Cout, hw_tile) VMEM tile
    x = x_ref[...]
    if x.dtype != jnp.float32:
        x = x.astype(jnp.float32)

    # Whole-block BatchNorm + ReLU (per-channel scale/shift lane-broadcast).
    # Padding lanes of a partial final tile feed harmless math; those output
    # lanes are clipped by Pallas on store.
    acts = jnp.maximum(x * scale_ref[...] + shift_ref[...], 0.0)   # (Cin, T)

    if use_mxu:
        # (Cout, Cin) @ (Cin, T) on the MXU — one op, one block store.
        out = jax.lax.dot_general(
            w_ref[...], acts,
            dimension_numbers=(((1,), (0,)), ((), ())),
            preferred_element_type=jnp.float32)                    # (Cout, T)
    else:
        # Small channel counts: broadcast (Cin,1) weight column over the acts
        # block (VPU) + sublane reduce (XLU); MXU would be <1% occupied.
        wt = w_ref[...]                                            # (Cin, Cout)
        cout = o_ref.shape[0]
        rows = [jnp.sum(acts * wt[:, co:co + 1], axis=0, keepdims=True)
                for co in range(cout)]
        out = rows[0] if cout == 1 else jnp.concatenate(rows, axis=0)

    o_ref[...] = out.astype(o_ref.dtype)


# --------------------------------------------------------------------------
# Tile / VMEM planning (padding-aware, per TPU generation)
# --------------------------------------------------------------------------
def _tile_plan(hw, cin, cout, nr):
    cin_p = _round_up(max(cin, 1), 8)      # f32 sublane padding
    cout_p = _round_up(max(cout, 1), 8)

    try:
        vmem_cap = int(pltpu.get_tpu_info().vmem_capacity_bytes)
    except Exception:
        vmem_cap = 64 << 20
    if vmem_cap >= (100 << 20):            # v5e / v6e: 128 MiB VMEM
        max_payload = 8 << 20
        limit_cap = 64 << 20
    else:                                  # v7x: 64 MiB VMEM
        max_payload = 3 << 20
        limit_cap = 30 << 20

    # ---- pass-2 spatial tile (padded in + out bytes per lane) ----
    per_lane_bytes = 4 * (cin_p + cout_p)
    cap_lanes = max(128, (max_payload // per_lane_bytes) // 128 * 128)
    hw_tile2 = hw if hw <= cap_lanes else cap_lanes
    fp2 = 2 * 4 * (cin_p + cout_p) * hw_tile2 + (1 << 20)   # double-buffered
    vmem2 = int(min(limit_cap, max(4 << 20, fp2)))

    # ---- pass-1 tiles (x viewed as (N*Cin, HW), 8-row sublane packing) ----
    cap_lanes1 = max(128, (max_payload // (4 * 8)) // 128 * 128)
    hw_tile1 = hw if hw <= cap_lanes1 else cap_lanes1
    if nr % 8 == 0:
        row_tile = 8
        while (row_tile * 2 <= nr and nr % (row_tile * 2) == 0
               and 4 * (row_tile * 2) * hw_tile1 <= max_payload):
            row_tile *= 2
    else:
        row_tile = nr
    fp1 = 2 * 4 * _round_up(row_tile, 8) * hw_tile1 + (1 << 20)
    vmem1 = int(min(limit_cap, max(4 << 20, fp1)))

    return hw_tile2, vmem2, hw_tile1, row_tile, vmem1


# --------------------------------------------------------------------------
# Wrapper
# --------------------------------------------------------------------------
@functools.partial(jax.jit, static_argnames=("eps",))
def compress_forward(x_nchw, gamma, beta, conv_w, *, eps=1e-5):
    """x_nchw: (N, Cin, H, W); conv_w: (Cout, Cin) or (Cout, Cin, 1, 1)."""
    N, Cin, H, W = x_nchw.shape
    Cout = conv_w.shape[0]
    HW = H * W
    NR = N * Cin

    hw_tile2, vmem2, hw_tile1, row_tile, vmem1 = _tile_plan(HW, Cin, Cout, NR)

    # NCHW kept native; both views are free reshapes (no transposes).
    x2 = x_nchw.reshape(NR, HW)            # pass-1 view: rows = (n, c)
    x3 = x_nchw.reshape(N, Cin, HW)        # pass-2 view

    n_rows = NR // row_tile
    n_hw1 = pl.cdiv(HW, hw_tile1)

    # ---- Pass 1: per-(n, c) partial statistics, fused in Pallas ----
    sums, sumsqs = pl.pallas_call(
        functools.partial(_bn_stats_kernel, hw=HW, hw_tile=hw_tile1),
        out_shape=(
            jax.ShapeDtypeStruct((NR, 1), jnp.float32),
            jax.ShapeDtypeStruct((NR, 1), jnp.float32),
        ),
        grid_spec=pltpu.PrefetchScalarGridSpec(
            num_scalar_prefetch=0,
            grid=(n_rows, n_hw1),
            in_specs=[pl.BlockSpec((row_tile, hw_tile1), lambda i, j: (i, j))],
            out_specs=(
                pl.BlockSpec((row_tile, 1), lambda i, j: (i, 0)),
                pl.BlockSpec((row_tile, 1), lambda i, j: (i, 0)),
            ),
        ),
        compiler_params=pltpu.CompilerParams(
            dimension_semantics=("parallel", "arbitrary"),
            vmem_limit_bytes=vmem1,
        ),
        cost_estimate=pl.CostEstimate(
            flops=3 * NR * HW,
            transcendentals=0,
            bytes_accessed=4 * NR * HW,
        ),
    )(x2)

    # Fold (n, c) partials into per-channel scale/shift (f32 accumulation).
    # NOTE: E[x^2]-E[x]^2 in f32 can lose precision for inputs with very large
    # means / element counts; fine at 1e-4 tolerances for this module.
    ch_sum = jnp.sum(sums.reshape(N, Cin), axis=0)
    ch_sumsq = jnp.sum(sumsqs.reshape(N, Cin), axis=0)
    inv_count = 1.0 / float(N * HW)
    mean = ch_sum * inv_count
    var = jnp.maximum(ch_sumsq * inv_count - mean * mean, 0.0)
    scale = gamma.astype(jnp.float32) * jax.lax.rsqrt(var + eps)
    shift = beta.astype(jnp.float32) - mean * scale
    scale_col = scale.reshape(Cin, 1)                 # (Cin, 1) VMEM column
    shift_col = shift.reshape(Cin, 1)

    # Channel-mix path selection: MXU only when both dims reach tile scale.
    use_mxu = (Cin >= 8) and (Cout >= 8)
    w = conv_w.reshape(Cout, Cin).astype(jnp.float32)
    w_arg = w if use_mxu else w.T                     # (Cout,Cin) or (Cin,Cout)

    n_hw2 = pl.cdiv(HW, hw_tile2)

    # ---- Pass 2: fused normalize + ReLU + 1x1 conv ----
    out3 = pl.pallas_call(
        functools.partial(_compress_kernel, use_mxu=use_mxu),
        out_shape=jax.ShapeDtypeStruct((N, Cout, HW), jnp.float32),
        grid_spec=pltpu.PrefetchScalarGridSpec(
            num_scalar_prefetch=0,
            grid=(N, n_hw2),
            in_specs=[
                pl.BlockSpec((Cin, 1), lambda n, j: (0, 0)),      # scale (resident)
                pl.BlockSpec((Cin, 1), lambda n, j: (0, 0)),      # shift (resident)
                pl.BlockSpec(w_arg.shape, lambda n, j: (0, 0)),   # conv weight
                pl.BlockSpec((None, Cin, hw_tile2), lambda n, j: (n, 0, j)),
            ],
            out_specs=pl.BlockSpec((None, Cout, hw_tile2), lambda n, j: (n, 0, j)),
        ),
        compiler_params=pltpu.CompilerParams(
            dimension_semantics=("parallel", "parallel"),
            vmem_limit_bytes=vmem2,
        ),
        cost_estimate=pl.CostEstimate(
            flops=2 * N * HW * Cin * Cout + 3 * N * HW * Cin,
            transcendentals=0,
            bytes_accessed=4 * N * HW * (Cin + Cout),
        ),
    )(scale_col, shift_col, w_arg, x3)

    # Free reshape back to NCHW.
    return out3.reshape(N, Cout, H, W)


# --------------------------------------------------------------------------
# Pure-JAX reference (PyTorch training-mode semantics)
# --------------------------------------------------------------------------
def _reference(x_nchw, gamma, beta, conv_w, eps=1e-5):
    mean = jnp.mean(x_nchw, axis=(0, 2, 3), keepdims=True)
    var = jnp.mean((x_nchw - mean) ** 2, axis=(0, 2, 3), keepdims=True)
    xn = (x_nchw - mean) / jnp.sqrt(var + eps)
    xn = xn * gamma[None, :, None, None] + beta[None, :, None, None]
    act = jnp.maximum(xn, 0.0)
    return jnp.einsum("oc,nchw->nohw", conv_w, act)


if __name__ == "__main__":
    key = jax.random.PRNGKey(0)
    k1, k2, k3, k4 = jax.random.split(key, 4)

    N, Cin, H, W = 2, 4, 16, 16          # input_channels = 4
    Cout = Cin // 2                       # compress halves the channels

    x = jax.random.normal(k1, (N, Cin, H, W), dtype=jnp.float32)
    gamma = 1.0 + 0.1 * jax.random.normal(k2, (Cin,), dtype=jnp.float32)
    beta = 0.1 * jax.random.normal(k3, (Cin,), dtype=jnp.float32)
    conv_w = jax.random.normal(k4, (Cout, Cin), dtype=jnp.float32) * 0.5

    out = compress_forward(x, gamma, beta, conv_w)
    jax.block_until_ready(out)

    ref = _reference(x, gamma, beta, conv_w)
    assert out.shape == (N, Cout, H, W)
    max_err = float(jnp.max(jnp.abs(out - ref)))
    assert jnp.allclose(out, ref, atol=1e-4, rtol=1e-4), max_err

    print("KERNEL_OK")
</pallas_src>

<mosaic_0001>
module attributes {stable_mosaic.version = 11 : i64} {
  func.func @_bn_stats_kernel(%arg0: i32, %arg1: i32, %arg2: memref<8x256xf32, #tpu.memory_space<vmem>>, %arg3: memref<8x1xf32, #tpu.memory_space<vmem>>, %arg4: memref<8x1xf32, #tpu.memory_space<vmem>>) attributes {dimension_semantics = [#tpu.dimension_semantics<parallel>, #tpu.dimension_semantics<arbitrary>], iteration_bounds = array<i64: 1, 1>, scalar_prefetch = 0 : i64, scratch_operands = 0 : i64, tpu.core_type = #tpu.core_type<tc>, window_params = [{transform_indices = @transform_0, window_bounds = array<i64: 8, 256>}, {transform_indices = @transform_1, window_bounds = array<i64: 8, 1>}, {transform_indices = @transform_2, window_bounds = array<i64: 8, 1>}]} {
    %c0_i32 = arith.constant 0 : i32
    %0 = arith.cmpi eq, %arg1, %c0_i32 : i32
    %1 = arith.extui %0 : i1 to i32
    %c0_i32_0 = arith.constant 0 : i32
    %2 = arith.cmpi ne, %1, %c0_i32_0 : i32
    scf.if %2 {
      %cst_11 = arith.constant 0.000000e+00 : f32
      %15 = vector.broadcast %cst_11 : f32 to vector<8x1xf32>
      %c0_12 = arith.constant 0 : index
      %c0_13 = arith.constant 0 : index
      %16 = vector.load %arg3[%c0_12, %c0_13] : memref<8x1xf32, #tpu.memory_space<vmem>>, vector<8x1xf32>
      tpu.vector_store %arg3[%c0_12, %c0_13], %15 {strides = array<i32>} : memref<8x1xf32, #tpu.memory_space<vmem>>, vector<8x1xf32>,
      %cst_14 = arith.constant 0.000000e+00 : f32
      %17 = vector.broadcast %cst_14 : f32 to vector<8x1xf32>
      %c0_15 = arith.constant 0 : index
      %c0_16 = arith.constant 0 : index
      %18 = vector.load %arg4[%c0_15, %c0_16] : memref<8x1xf32, #tpu.memory_space<vmem>>, vector<8x1xf32>
      tpu.vector_store %arg4[%c0_15, %c0_16], %17 {strides = array<i32>} : memref<8x1xf32, #tpu.memory_space<vmem>>, vector<8x1xf32>,
    } else {
    }
    %c0 = arith.constant 0 : index
    %c0_1 = arith.constant 0 : index
    %3 = vector.load %arg2[%c0, %c0_1] : memref<8x256xf32, #tpu.memory_space<vmem>>, vector<8x256xf32>
    %c0_2 = arith.constant 0 : index
    %c0_3 = arith.constant 0 : index
    %4 = vector.load %arg3[%c0_2, %c0_3] : memref<8x1xf32, #tpu.memory_space<vmem>>, vector<8x1xf32>
    %cst = arith.constant dense<0.000000e+00> : vector<8xf32>
    %5 = vector.multi_reduction <add>, %3, %cst [1] : vector<8x256xf32> to vector<8xf32>
    %6 = vector.shape_cast %5 : vector<8xf32> to vector<8x1xf32>
    %7 = arith.addf %4, %6 : vector<8x1xf32>
    %c0_4 = arith.constant 0 : index
    %c0_5 = arith.constant 0 : index
    %8 = vector.load %arg3[%c0_4, %c0_5] : memref<8x1xf32, #tpu.memory_space<vmem>>, vector<8x1xf32>
    tpu.vector_store %arg3[%c0_4, %c0_5], %7 {strides = array<i32>} : memref<8x1xf32, #tpu.memory_space<vmem>>, vector<8x1xf32>,
    %c0_6 = arith.constant 0 : index
    %c0_7 = arith.constant 0 : index
    %9 = vector.load %arg4[%c0_6, %c0_7] : memref<8x1xf32, #tpu.memory_space<vmem>>, vector<8x1xf32>
    %10 = arith.mulf %3, %3 : vector<8x256xf32>
    %cst_8 = arith.constant dense<0.000000e+00> : vector<8xf32>
    %11 = vector.multi_reduction <add>, %10, %cst_8 [1] : vector<8x256xf32> to vector<8xf32>
    %12 = vector.shape_cast %11 : vector<8xf32> to vector<8x1xf32>
    %13 = arith.addf %9, %12 : vector<8x1xf32>
    %c0_9 = arith.constant 0 : index
    %c0_10 = arith.constant 0 : index
    %14 = vector.load %arg4[%c0_9, %c0_10] : memref<8x1xf32, #tpu.memory_space<vmem>>, vector<8x1xf32>
    tpu.vector_store %arg4[%c0_9, %c0_10], %13 {strides = array<i32>} : memref<8x1xf32, #tpu.memory_space<vmem>>, vector<8x1xf32>,
    return
  }
  func.func @transform_0(%arg0: i32, %arg1: i32) -> (i32, i32) {
    %c0_i32 = arith.constant 0 : i32
    return %arg0, %arg1 : i32, i32
  }
  func.func @transform_1(%arg0: i32, %arg1: i32) -> (i32, i32) {
    %c0_i32 = arith.constant 0 : i32
    %c0_i32_0 = arith.constant 0 : i32
    return %arg0, %c0_i32 : i32, i32
  }
  func.func @transform_2(%arg0: i32, %arg1: i32) -> (i32, i32) {
    %c0_i32 = arith.constant 0 : i32
    %c0_i32_0 = arith.constant 0 : i32
    return %arg0, %c0_i32 : i32, i32
  }
}

module attributes {stable_mosaic.version = 11 : i64} {
  func.func @_compress_kernel(%arg0: i32, %arg1: i32, %arg2: memref<4x1xf32, #tpu.memory_space<vmem>>, %arg3: memref<4x1xf32, #tpu.memory_space<vmem>>, %arg4: memref<4x2xf32, #tpu.memory_space<vmem>>, %arg5: memref<1x4x256xf32, #tpu.memory_space<vmem>>, %arg6: memref<1x2x256xf32, #tpu.memory_space<vmem>>) attributes {dimension_semantics = [#tpu.dimension_semantics<parallel>, #tpu.dimension_semantics<parallel>], iteration_bounds = array<i64: 2, 1>, scalar_prefetch = 0 : i64, scratch_operands = 0 : i64, tpu.core_type = #tpu.core_type<tc>, window_params = [{pipeline_mode = #tpu.pipeline_mode<synchronous>, transform_indices = @transform_0, window_bounds = array<i64: 4, 1>}, {pipeline_mode = #tpu.pipeline_mode<synchronous>, transform_indices = @transform_1, window_bounds = array<i64: 4, 1>}, {pipeline_mode = #tpu.pipeline_mode<synchronous>, transform_indices = @transform_2, window_bounds = array<i64: 4, 2>}, {transform_indices = @transform_3, window_bounds = array<i64: 1, 4, 256>}, {transform_indices = @transform_4, window_bounds = array<i64: 1, 2, 256>}]} {
    %c0 = arith.constant 0 : index
    %c0_0 = arith.constant 0 : index
    %c0_1 = arith.constant 0 : index
    %0 = vector.load %arg5[%c0, %c0_0, %c0_1] : memref<1x4x256xf32, #tpu.memory_space<vmem>>, vector<1x4x256xf32>
    %1 = vector.shape_cast %0 : vector<1x4x256xf32> to vector<4x256xf32>
    %c0_2 = arith.constant 0 : index
    %c0_3 = arith.constant 0 : index
    %2 = vector.load %arg2[%c0_2, %c0_3] : memref<4x1xf32, #tpu.memory_space<vmem>>, vector<4x1xf32>
    %3 = vector.broadcast %2 : vector<4x1xf32> to vector<4x256xf32>
    %4 = arith.mulf %1, %3 : vector<4x256xf32>
    %c0_4 = arith.constant 0 : index
    %c0_5 = arith.constant 0 : index
    %5 = vector.load %arg3[%c0_4, %c0_5] : memref<4x1xf32, #tpu.memory_space<vmem>>, vector<4x1xf32>
    %6 = vector.broadcast %5 : vector<4x1xf32> to vector<4x256xf32>
    %7 = arith.addf %4, %6 : vector<4x256xf32>
    %cst = arith.constant 0.000000e+00 : f32
    %8 = vector.broadcast %cst : f32 to vector<4x256xf32>
    %9 = arith.maximumf %7, %8 : vector<4x256xf32>
    %c0_6 = arith.constant 0 : index
    %c0_7 = arith.constant 0 : index
    %10 = vector.load %arg4[%c0_6, %c0_7] : memref<4x2xf32, #tpu.memory_space<vmem>>, vector<4x2xf32>
    %11 = vector.extract_strided_slice %10 {offsets = [0, 0], sizes = [4, 1], strides = [1, 1]} : vector<4x2xf32> to vector<4x1xf32>
    %12 = vector.broadcast %11 : vector<4x1xf32> to vector<4x256xf32>
    %13 = arith.mulf %9, %12 : vector<4x256xf32>
    %cst_8 = arith.constant dense<0.000000e+00> : vector<256xf32>
    %14 = vector.multi_reduction <add>, %13, %cst_8 [0] : vector<4x256xf32> to vector<256xf32>
    %15 = vector.shape_cast %14 : vector<256xf32> to vector<1x256xf32>
    %16 = vector.extract_strided_slice %10 {offsets = [0, 1], sizes = [4, 1], strides = [1, 1]} : vector<4x2xf32> to vector<4x1xf32>
    %17 = vector.broadcast %16 : vector<4x1xf32> to vector<4x256xf32>
    %18 = arith.mulf %9, %17 : vector<4x256xf32>
    %cst_9 = arith.constant dense<0.000000e+00> : vector<256xf32>
    %19 = vector.multi_reduction <add>, %18, %cst_9 [0] : vector<4x256xf32> to vector<256xf32>
    %20 = vector.shape_cast %19 : vector<256xf32> to vector<1x256xf32>
    %21 = tpu.concatenate %15, %20 in 0 : vector<1x256xf32>, vector<1x256xf32> -> vector<2x256xf32>
    %c0_10 = arith.constant 0 : index
    %c0_11 = arith.constant 0 : index
    %c0_12 = arith.constant 0 : index
    %22 = vector.load %arg6[%c0_10, %c0_11, %c0_12] : memref<1x2x256xf32, #tpu.memory_space<vmem>>, vector<1x2x256xf32>
    %23 = vector.shape_cast %22 : vector<1x2x256xf32> to vector<2x256xf32>
    %24 = vector.shape_cast %21 : vector<2x256xf32> to vector<1x2x256xf32>
    tpu.vector_store %arg6[%c0_10, %c0_11, %c0_12], %24 {strides = array<i32>} : memref<1x2x256xf32, #tpu.memory_space<vmem>>, vector<1x2x256xf32>,
    return
  }
  func.func @transform_0(%arg0: i32, %arg1: i32) -> (i32, i32) {
    %c0_i32 = arith.constant 0 : i32
    %c0_i32_0 = arith.constant 0 : i32
    %c0_i32_1 = arith.constant 0 : i32
    return %c0_i32, %c0_i32_0 : i32, i32
  }
  func.func @transform_1(%arg0: i32, %arg1: i32) -> (i32, i32) {
    %c0_i32 = arith.constant 0 : i32
    %c0_i32_0 = arith.constant 0 : i32
    %c0_i32_1 = arith.constant 0 : i32
    return %c0_i32, %c0_i32_0 : i32, i32
  }
  func.func @transform_2(%arg0: i32, %arg1: i32) -> (i32, i32) {
    %c0_i32 = arith.constant 0 : i32
    %c0_i32_0 = arith.constant 0 : i32
    %c0_i32_1 = arith.constant 0 : i32
    return %c0_i32, %c0_i32_0 : i32, i32
  }
  func.func @transform_3(%arg0: i32, %arg1: i32) -> (i32, i32, i32) {
    %c0_i32 = arith.constant 0 : i32
    %c0_i32_0 = arith.constant 0 : i32
    return %arg0, %c0_i32, %arg1 : i32, i32, i32
  }
  func.func @transform_4(%arg0: i32, %arg1: i32) -> (i32, i32, i32) {
    %c0_i32 = arith.constant 0 : i32
    %c0_i32_0 = arith.constant 0 : i32
    return %arg0, %c0_i32, %arg1 : i32, i32, i32
  }
}

</mosaic_0001>

<llo_original>
// kernel: compress_forward.2
$region0: #{compress_forward.2}
  #allocation0 [shape = 'u32[]', space=smem, size = 0x4, offset = 0x4, fixed_abs, tag = 'smem constant byte address 0x4 - core index']
  #allocation1 [shape = 'u32[72,128]{1,0:T(1,128)}', space=vmem, size = 0x9000, scoped, tag = 'internal scratch']
  %s0 = inlined_call_operand.vmem [shape: f32[8,256], index: 0, kind: input, shape index: {}]
  %s1 = inlined_call_operand.vmem [shape: f32[8,1], index: 1, kind: output, shape index: {0}]
  %s2 = inlined_call_operand.vmem [shape: f32[8,1], index: 2, kind: output, shape index: {1}]
  %3 = xla_tuple %s1, %s2
  %s4 = sld [smem:[#allocation0]]
  $region26: #{compress_forward.2} parent=0
    _
  %s6 = ssub.s32 1, %s4
  %s7 = scalar_select 0, %s6, %s4
  // Predicated region
  $region2: #{compress_forward.2} parent=0 // pred_check
    _
  $region3: #{compress_forward.2} parent=0 // pred_check_branch
    %9 = sbr.rel (0) target = $region5
  $region4: #{compress_forward.2} parent=0 // pred_region
    _
  $region5: #{compress_forward.2} parent=0 // pred_fallthru
    _
  %p10 = scmp.eq.s32.totalorder 0, 0
  // Predicated region
  $region6: #{compress_forward.2} parent=0 // pred_check
    %p11 = pneg %p10
  $region7: #{compress_forward.2} parent=0 // pred_check_branch
    %13 = sbr.rel (%p11) target = $region9
  $region8: #{compress_forward.2} parent=0 // pred_region
    %vm14 = vcmask 7168
    %15 = vst.msk [vmem:[%s1] sm:$0xff] %vm14, 0.0
    %16 = vst.msk [vmem:[%s2] sm:$0xff] %vm14, 0.0
  $region9: #{compress_forward.2} parent=0 // pred_fallthru
    _
  %v17 = vld [vmem:[%s0] sm:$0xff]
  %v18 = vld [vmem:[%s0 + $0x8] sm:$0xff]
  %v19 = vld [vmem:[%s1] sm:$0xff]
  %v20 = vadd.f32 %v17, %v18
  %21 = vadd.xlane.f32.xlu0 %v20
  %v22 = vpop.xlane.xlu0 %21
  %v23 = vadd.f32 %v19, %v22
  %vm24 = vcmask 7168
  %25 = vst.msk [vmem:[%s1] sm:$0xff] %vm24, %v23
  %v26 = vld [vmem:[%s2] sm:$0xff]
  %v27 = vmul.f32 %v17, %v17
  %v28 = vmul.f32 %v18, %v18
  %v29 = vadd.f32 %v27, %v28
  %30 = vadd.xlane.f32.xlu0 %v29
  %v31 = vpop.xlane.xlu0 %30
  %v32 = vadd.f32 %v26, %v31
  %33 = vst.msk [vmem:[%s2] sm:$0xff] %vm24, %v32
  // Predicated region
  $region10: #{compress_forward.2} parent=0 // pred_check
    _
  $region11: #{compress_forward.2} parent=0 // pred_check_branch
    %35 = sbr.rel (0) target = $region13
  $region12: #{compress_forward.2} parent=0 // pred_region
    _
  $region13: #{compress_forward.2} parent=0 // pred_fallthru
    _
  // Predicated region
  $region14: #{compress_forward.2} parent=0 // pred_check
    _
  $region15: #{compress_forward.2} parent=0 // pred_check_branch
    %37 = sbr.rel (0) target = $region17
  $region16: #{compress_forward.2} parent=0 // pred_region
    _
  $region17: #{compress_forward.2} parent=0 // pred_fallthru
    _
  // Predicated region
  $region18: #{compress_forward.2} parent=0 // pred_check
    _
  $region19: #{compress_forward.2} parent=0 // pred_check_branch
    %39 = sbr.rel (0) target = $region21
  $region20: #{compress_forward.2} parent=0 // pred_region
    _
  $region21: #{compress_forward.2} parent=0 // pred_fallthru
    _
  // Predicated region
  $region22: #{compress_forward.2} parent=0 // pred_check
    _
  $region23: #{compress_forward.2} parent=0 // pred_check_branch
    %41 = sbr.rel (0) target = $region25
  $region24: #{compress_forward.2} parent=0 // pred_region
    _
  $region25: #{compress_forward.2} parent=0 // pred_fallthru
    _

// kernel: compress_forward.3
$region0: #{compress_forward.3}
  #allocation0 [shape = 'u32[]', space=smem, size = 0x4, offset = 0x4, fixed_abs, tag = 'smem constant byte address 0x4 - core index']
  #allocation1 [shape = 'u32[72,128]{1,0:T(1,128)}', space=vmem, size = 0x9000, scoped, tag = 'internal scratch']
  %s0 = inlined_call_operand.vmem [shape: f32[4,1], index: 0, kind: input, shape index: {}]
  %s1 = inlined_call_operand.vmem [shape: f32[4,1], index: 1, kind: input, shape index: {}]
  %s2 = inlined_call_operand.vmem [shape: f32[4,2], index: 2, kind: input, shape index: {}]
  %s3 = inlined_call_operand.vmem [shape: f32[2,4,256], index: 3, kind: input, shape index: {}]
  %s4 = inlined_call_operand.vmem [shape: f32[2,2,256], index: 4, kind: output, shape index: {}]
  %s5 = sld [smem:[#allocation0]]
  $region49: #{compress_forward.3} parent=0
    _
  %s7 = ssub.s32 1, %s5
  %s8 = scalar_select 0, %s7, %s5
  loop: start=0, step=1, limit=4
  $region2: #{compress_forward.3} parent=0 // loop_pre_header
    _
  $region3: #{compress_forward.3} parent=0 // loop_header
    %s10 = sphi 0, %s14
    %p11 = scmp.ge.s32.totalorder %s10, 4
    %s17 = sphi 0, %s29
    %s18 = sphi 0, %s25
    %s19 = sphi 0, %s17
    %s20 = sphi 0, %s18
    %s21 = sphi 0, %s19
    %s22 = sphi 0, %s20
    %s30 = sphi 0, %s30
    %s32 = sphi 0, %s30
    %s33 = sphi 0, %s32
    %s47 = sphi 0, %s33
    %s51 = sphi 0, %s51
    %s53 = sphi 0, %s51
    %s54 = sphi 0, %s53
    %s68 = sphi 0, %s54
    %s72 = sphi 0, %s72
    %s74 = sphi 0, %s72
    %s75 = sphi 0, %s74
    %s89 = sphi 0, %s75
    %s97 = sphi 0, %s99
    %s100 = sphi 0, %s97
    %s101 = sphi 0, %s100
    %s117 = sphi 0, %s101
    %s125 = sphi 0, %s127
    %s128 = sphi 0, %s125
    %s129 = sphi 0, %s128
    %s145 = sphi 0, %s129
  $region4: #{compress_forward.3} parent=0 // loop_header_branch
    %13 = sbr.rel (%p11) target = $region8
  $region5: #{compress_forward.3} parent=0 // loop_body
    %s15 = ssub.s32 %s10, 1
    %s16 = ssub.s32 %s10, 2
    %s23 = sadd.s32 1, %s18
    %p24 = scmp.ge.s32.totalorder %s23, 1
    %s25 = scalar_select %p24, 0, %s23
    %s26 = sadd.s32 1, %s17
    %s27 = scalar_select %p24, %s26, %s17
    %p28 = scmp.ge.s32.totalorder %s27, 2
    %s29 = scalar_select %p28, 0, %s27
    %s31 = sadd.s32 %s30, 1
    %p34 = scmp.eq.s32.totalorder %s10, 1
    %p35 = scmp.ne.s32.totalorder %s30, %s32
    %p36 = scmp.eq.s32.totalorder %s10, 0
    %p37 = por %p35, %p36
    %p38 = scmp.ne.s32.totalorder %s30, %s32
    %p39 = scmp.eq.s32.totalorder %s15, 1
    %p40 = por %p38, %p39
    %p41 = scmp.ne.s32.totalorder %s32, %s33
    %p42 = scmp.eq.s32.totalorder %s15, 0
    %p43 = por %p41, %p42
    %p44 = scmp.ne.s32.totalorder %s32, %s33
    %p45 = scmp.eq.s32.totalorder %s16, 1
    %p46 = por %p44, %p45
    %p48 = scmp.ne.s32.totalorder %s33, %s47
    %p49 = scmp.eq.s32.totalorder %s16, 0
    %p50 = por %p48, %p49
    %s52 = sadd.s32 %s51, 1
    %p55 = scmp.eq.s32.totalorder %s10, 1
    %p56 = scmp.ne.s32.totalorder %s51, %s53
    %p57 = scmp.eq.s32.totalorder %s10, 0
    %p58 = por %p56, %p57
    %p59 = scmp.ne.s32.totalorder %s51, %s53
    %p60 = scmp.eq.s32.totalorder %s15, 1
    %p61 = por %p59, %p60
    %p62 = scmp.ne.s32.totalorder %s53, %s54
    %p63 = scmp.eq.s32.totalorder %s15, 0
    %p64 = por %p62, %p63
    %p65 = scmp.ne.s32.totalorder %s53, %s54
    %p66 = scmp.eq.s32.totalorder %s16, 1
    %p67 = por %p65, %p66
    %p69 = scmp.ne.s32.totalorder %s54, %s68
    %p70 = scmp.eq.s32.totalorder %s16, 0
    %p71 = por %p69, %p70
    %s73 = sadd.s32 %s72, 1
    %p76 = scmp.eq.s32.totalorder %s10, 1
    %p77 = scmp.ne.s32.totalorder %s72, %s74
    %p78 = scmp.eq.s32.totalorder %s10, 0
    %p79 = por %p77, %p78
    %p80 = scmp.ne.s32.totalorder %s72, %s74
    %p81 = scmp.eq.s32.totalorder %s15, 1
    %p82 = por %p80, %p81
    %p83 = scmp.ne.s32.totalorder %s74, %s75
    %p84 = scmp.eq.s32.totalorder %s15, 0
    %p85 = por %p83, %p84
    %p86 = scmp.ne.s32.totalorder %s74, %s75
    %p87 = scmp.eq.s32.totalorder %s16, 1
    %p88 = por %p86, %p87
    %p90 = scmp.ne.s32.totalorder %s75, %s89
    %p91 = scmp.eq.s32.totalorder %s16, 0
    %p92 = por %p90, %p91
    %s93 = ssub.s32 %s17, %s29
    %s94 = ssub.s32 %s18, %s25
    %s95 = sor.u32 %s93, %s94
    %p96 = scmp.eq.s32.totalorder %s95, 0
    %s98 = sadd.s32 %s97, 1
    %s99 = scalar_select %p96, %s97, %s98
    %p102 = pneg %p96
    %p103 = scmp.eq.s32.totalorder %s10, 1
    %p104 = por %p102, %p103
    %p105 = scmp.ne.s32.totalorder %s97, %s100
    %p106 = scmp.eq.s32.totalorder %s10, 0
    %p107 = por %p105, %p106
    %p108 = scmp.ne.s32.totalorder %s97, %s100
    %p109 = scmp.eq.s32.totalorder %s15, 1
    %p110 = por %p108, %p109
    %p111 = scmp.ne.s32.totalorder %s100, %s101
    %p112 = scmp.eq.s32.totalorder %s15, 0
    %p113 = por %p111, %p112
    %p114 = scmp.ne.s32.totalorder %s100, %s101
    %p115 = scmp.eq.s32.totalorder %s16, 1
    %p116 = por %p114, %p115
    %p118 = scmp.ne.s32.totalorder %s101, %s117
    %p119 = scmp.eq.s32.totalorder %s16, 0
    %p120 = por %p118, %p119
    %s121 = ssub.s32 %s17, %s29
    %s122 = ssub.s32 %s18, %s25
    %s123 = sor.u32 %s121, %s122
    %p124 = scmp.eq.s32.totalorder %s123, 0
    %s126 = sadd.s32 %s125, 1
    %s127 = scalar_select %p124, %s125, %s126
    %p130 = pneg %p124
    %p131 = scmp.eq.s32.totalorder %s10, 1
    %p132 = por %p130, %p131
    %p133 = scmp.ne.s32.totalorder %s125, %s128
    %p134 = scmp.eq.s32.totalorder %s10, 0
    %p135 = por %p133, %p134
    %p136 = scmp.ne.s32.totalorder %s125, %s128
    %p137 = scmp.eq.s32.totalorder %s15, 1
    %p138 = por %p136, %p137
    %p139 = scmp.ne.s32.totalorder %s128, %s129
    %p140 = scmp.eq.s32.totalorder %s15, 0
    %p141 = por %p139, %p140
    %p142 = scmp.ne.s32.totalorder %s128, %s129
    %p143 = scmp.eq.s32.totalorder %s16, 1
    %p144 = por %p142, %p143
    %p146 = scmp.ne.s32.totalorder %s129, %s145
    %p147 = scmp.eq.s32.totalorder %s16, 0
    %p148 = por %p146, %p147
    %p149 = scmp.le.s32.totalorder 1, %s10
    %p150 = scmp.lt.s32.totalorder %s10, 3
    %p151 = pnand %p149, %p150
    %p152 = pneg %p151
    // Predicated region
    $region9: #{compress_forward.3} parent=5 // pred_check
      _
    $region10: #{compress_forward.3} parent=5 // pred_check_branch
      %154 = sbr.rel (%p151) target = $region12
    $region11: #{compress_forward.3} parent=5 // pred_region
      %s155 = ssub.s32 %s10, 1
      // Predicated region
      $region13: #{compress_forward.3} parent=11 // pred_check
        %p156 = pneg %p43
      $region14: #{compress_forward.3} parent=11 // pred_check_branch
        %158 = sbr.rel (%p156) target = $region16
      $region15: #{compress_forward.3} parent=11 // pred_region
        _
      $region16: #{compress_forward.3} parent=11 // pred_fallthru
        _
      // Predicated region
      $region17: #{compress_forward.3} parent=11 // pred_check
        %p159 = pneg %p64
      $region18: #{compress_forward.3} parent=11 // pred_check_branch
        %161 = sbr.rel (%p159) target = $region20
      $region19: #{compress_forward.3} parent=11 // pred_region
        _
      $region20: #{compress_forward.3} parent=11 // pred_fallthru
        _
      // Predicated region
      $region21: #{compress_forward.3} parent=11 // pred_check
        %p162 = pneg %p85
      $region22: #{compress_forward.3} parent=11 // pred_check_branch
        %164 = sbr.rel (%p162) target = $region24
      $region23: #{compress_forward.3} parent=11 // pred_region
        _
      $region24: #{compress_forward.3} parent=11 // pred_fallthru
        _
    $region12: #{compress_forward.3} parent=5 // pred_fallthru
      _
    %p165 = scmp.lt.s32.totalorder %s10, 2
    // Predicated region
    $region25: #{compress_forward.3} parent=5 // pred_check
      %p166 = pneg %p165
    $region26: #{compress_forward.3} parent=5 // pred_check_branch
      %168 = sbr.rel (%p166) target = $region28
    $region27: #{compress_forward.3} parent=5 // pred_region
      // Predicated region
      $region29: #{compress_forward.3} parent=27 // pred_check
        %p169 = pneg %p107
      $region30: #{compress_forward.3} parent=27 // pred_check_branch
        %171 = sbr.rel (%p169) target = $region32
      $region31: #{compress_forward.3} parent=27 // pred_region
        %s172 = smul.u32 2, %s18
        %p173 = scmp.lt.s32.totalorder %s17, 1
        %s174 = scalar_select %p173, %s17, 1
        %p175 = scmp.lt.s32.totalorder %s172, 1
        %s176 = scalar_select %p175, %s172, 1
        %s177 = smul.addr %s174, 2
        %s178 = sadd.s32 %s176, %s177
        %s179 = smul.addr %s178, 4
        %s180 = scalar_lea.vmem %s3, %s179
        %s181 = smul.u32 2, %s18
      $region32: #{compress_forward.3} parent=27 // pred_fallthru
        _
    $region28: #{compress_forward.3} parent=5 // pred_fallthru
      _
    %p182 = scmp.le.s32.totalorder 1, %s10
    %p183 = scmp.lt.s32.totalorder %s10, 3
    %p184 = pnand %p182, %p183
    %p185 = pneg %p184
    // Predicated region
    $region33: #{compress_forward.3} parent=5 // pred_check
      _
    $region34: #{compress_forward.3} parent=5 // pred_check_branch
      %187 = sbr.rel (%p184) target = $region36
    $region35: #{compress_forward.3} parent=5 // pred_region
      %s188 = ssub.s32 %s10, 1
      %p189 = pneg %p43
      %p190 = pneg %p40
      %p191 = pneg %p64
      %p192 = pneg %p61
      %p193 = pneg %p85
      %p194 = pneg %p82
      %s195 = smul.u32 2, %s20
      %p196 = scmp.lt.s32.totalorder %s19, 1
      %s197 = scalar_select %p196, %s19, 1
      %p198 = scmp.lt.s32.totalorder %s195, 1
      %s199 = scalar_select %p198, %s195, 1
      %s200 = smul.addr %s197, 2
      %s201 = sadd.s32 %s199, %s200
      %s202 = smul.addr %s201, 4
      %s203 = scalar_lea.vmem %s3, %s202
      %p204 = pneg %p113
      %p205 = pneg %p110
      %p206 = pneg %p141
      %p207 = pneg %p138
      %s208 = smul.u32 2, %s20
      %p209 = scmp.lt.s32.totalorder %s19, 1
      %s210 = scalar_select %p209, %s19, 1
      %p211 = scmp.lt.s32.totalorder %s208, 1
      %s212 = scalar_select %p211, %s208, 1
      %s213 = smul.addr %s210, 2
      %s214 = sadd.s32 %s212, %s213
      %s215 = smul.addr %s214, 2
      %s216 = scalar_lea.vmem %s4, %s215
      %s217 = smul.u32 2, %s20
      %p218 = scmp.lt.s32.totalorder %s19, 1
      %s219 = scalar_select %p218, %s19, 1
      %p220 = scmp.lt.s32.totalorder %s217, 1
      %s221 = scalar_select %p220, %s217, 1
      %s222 = smul.addr %s219, 2
      %s223 = sadd.s32 %s221, %s222
      %s224 = smul.addr %s223, 4
      %s225 = scalar_lea.vmem %s3, %s224
      %s226 = smul.u32 2, %s20
      %s227 = smul.u32 2, %s20
      %p228 = scmp.lt.s32.totalorder %s19, 1
      %s229 = scalar_select %p228, %s19, 1
      %p230 = scmp.lt.s32.totalorder %s227, 1
      %s231 = scalar_select %p230, %s227, 1
      %s232 = smul.addr %s229, 2
      %s233 = sadd.s32 %s231, %s232
      %s234 = smul.addr %s233, 2
      %s235 = scalar_lea.vmem %s4, %s234
      %s236 = smul.u32 2, %s20
      %v237 = vld [vmem:[%s225] sm:$0xff]
      %v238 = vld [vmem:[%s0] sm:$0xf]
      %240 = vset.pattern.permute.xlu0 0
      %241 = vperm.xlu0 %240, %v238
      %v242 = vpop.permute.xlu0 %241
      %v244 = vunpack.c.l.s4 839922192
      %v245 = vunpack.c.0.s8 %v244
      %v246 = vperm.slane %v242, %v245
      %v248 = vmul.f32 %v237, %v246
      %v249 = vld [vmem:[%s1] sm:$0xf]
      %251 = vset.pattern.permute.xlu0 0
      %252 = vperm.xlu0 %251, %v249
      %v253 = vpop.permute.xlu0 %252
      %v255 = vunpack.c.l.s4 839922192
      %v256 = vunpack.c.0.s8 %v255
      %v257 = vperm.slane %v253, %v256
      %v259 = vadd.f32 %v248, %v257
      %v260 = vmax.f32 %v259, 0.0
      %v261 = vld [vmem:[%s2] sm:$0xf]
      %263 = vset.pattern.permute.xlu0 0
      %264 = vperm.xlu0 %263, %v261
      %v265 = vpop.permute.xlu0 %264
      %v267 = vunpack.c.l.s4 839922192
      %v268 = vunpack.c.0.s8 %v267
      %v269 = vperm.slane %v265, %v268
      %v271 = vmul.f32 %v260, %v269
      %273 = vst [vmem:[#allocation1] ss:$2 sm:$0xff] %v271
      %v274 = vld.sshfl [vmem:[#allocation1] sm:$0xff pattern:$0x75316420]
      %v275 = vld.sshfl [vmem:[#allocation1 + $0x8] sm:$0xff pattern:$0x75316420]
      %vm278 = vcmask 1043456
      %v279 = vsel %vm278, %v274, 0.0
      %v280 = vrot.slane %v279, 4
      %v281 = vadd.f32 %v279, %v280
      %v282 = vrot.slane %v281, 2
      %v283 = vadd.f32 %v281, %v282
      %v284 = vrot.slane %v283, 1
      %v285 = vadd.f32 %v283, %v284
      %v286 = vsel %vm278, %v275, 0.0
      %v287 = vrot.slane %v286, 4
      %v288 = vadd.f32 %v286, %v287
      %v289 = vrot.slane %v288, 2
      %v290 = vadd.f32 %v288, %v289
      %v291 = vrot.slane %v290, 1
      %v292 = vadd.f32 %v290, %v291
      %293 = vset.pattern.permute.xlu0 1
      %294 = vperm.xlu0 %293, %v261
      %v295 = vpop.permute.xlu0 %294
      %v297 = vunpack.c.l.s4 839922192
      %v298 = vunpack.c.0.s8 %v297
      %v299 = vperm.slane %v295, %v298
      %v301 = vmul.f32 %v260, %v299
      %303 = vst [vmem:[#allocation1] ss:$2 sm:$0xff] %v301
      %v304 = vld.sshfl [vmem:[#allocation1] sm:$0xff pattern:$0x75316420]
      %v305 = vld.sshfl [vmem:[#allocation1 + $0x8] sm:$0xff pattern:$0x75316420]
      %v308 = vsel %vm278, %v304, 0.0
      %v309 = vrot.slane %v308, 4
      %v310 = vadd.f32 %v308, %v309
      %v311 = vrot.slane %v310, 2
      %v312 = vadd.f32 %v310, %v311
      %v313 = vrot.slane %v312, 1
      %v314 = vadd.f32 %v312, %v313
      %v315 = vsel %vm278, %v305, 0.0
      %v316 = vrot.slane %v315, 4
      %v317 = vadd.f32 %v315, %v316
      %v318 = vrot.slane %v317, 2
      %v319 = vadd.f32 %v317, %v318
      %v320 = vrot.slane %v319, 1
      %v321 = vadd.f32 %v319, %v320
      %vm322 = vcmask 1040384
      %v323 = vsel %vm322, %v285, %v314
      %v324 = vsel %vm322, %v292, %v321
      %v327 = vrot.slane %v324, 6
      %vm328 = vcmask 1041408
      %v329 = vsel %vm328, %v323, %v327
      %331 = vst [vmem:[%s235] sm:$0xf] %v329
      %s332 = smul.u32 2, %s20
      %p333 = scmp.lt.s32.totalorder %s19, 1
      %s334 = scalar_select %p333, %s19, 1
      %p335 = scmp.lt.s32.totalorder %s332, 1
      %s336 = scalar_select %p335, %s332, 1
      %s337 = smul.addr %s334, 2
      %s338 = sadd.s32 %s336, %s337
      %s339 = smul.addr %s338, 2
      %s340 = scalar_lea.vmem %s4, %s339
      // Predicated region
      $region37: #{compress_forward.3} parent=35 // pred_check
        %p341 = pneg %p138
      $region38: #{compress_forward.3} parent=35 // pred_check_branch
        %343 = sbr.rel (%p341) target = $region40
      $region39: #{compress_forward.3} parent=35 // pred_region
        %s344 = smul.u32 2, %s20
      $region40: #{compress_forward.3} parent=35 // pred_fallthru
        _
    $region36: #{compress_forward.3} parent=5 // pred_fallthru
      _
    %p345 = scmp.le.s32.totalorder 2, %s10
    // Predicated region
    $region41: #{compress_forward.3} parent=5 // pred_check
      %p346 = pneg %p345
    $region42: #{compress_forward.3} parent=5 // pred_check_branch
      %348 = sbr.rel (%p346) target = $region44
    $region43: #{compress_forward.3} parent=5 // pred_region
      %s349 = ssub.s32 %s10, 2
      // Predicated region
      $region45: #{compress_forward.3} parent=43 // pred_check
        %p350 = pneg %p144
      $region46: #{compress_forward.3} parent=43 // pred_check_branch
        %352 = sbr.rel (%p350) target = $region48
      $region47: #{compress_forward.3} parent=43 // pred_region
        %s353 = smul.u32 2, %s22
        %p354 = scmp.lt.s32.totalorder %s21, 1
        %s355 = scalar_select %p354, %s21, 1
        %p356 = scmp.lt.s32.totalorder %s353, 1
        %s357 = scalar_select %p356, %s353, 1
        %s358 = smul.addr %s355, 2
        %s359 = sadd.s32 %s357, %s358
        %s360 = smul.addr %s359, 2
        %s361 = scalar_lea.vmem %s4, %s360
      $region48: #{compress_forward.3} parent=43 // pred_fallthru
        _
    $region44: #{compress_forward.3} parent=5 // pred_fallthru
      _
  $region6: #{compress_forward.3} parent=0 // loop_footer
    %s14 = sadd.s32 1, %s10
  $region7: #{compress_forward.3} parent=0 // loop_footer_branch
    %9 = sbr.rel target = $region3
  $region8: #{compress_forward.3} parent=0 // loop_exit
    _

</llo_original>
